<compile_context>
chip_gen: v7x
topology: tpu7x:2x2x1
jax: 0.10.0
libtpu: 0.0.40
codegen_flags: <defaults>
</compile_context>

<pallas_src>
import functools

import jax
import jax.numpy as jnp
from jax import lax
from jax.experimental import pallas as pl
from jax.experimental.pallas import tpu as pltpu

IN_F = 3
HID_F = 10
OUT_F = 3


def _round_up(n, m):
    return ((n + m - 1) // m) * m


def _pick_tile(b_pad, tb):
    """Largest multiple of 128 that is <= tb and divides b_pad."""
    tb = max(128, (min(tb, b_pad) // 128) * 128)
    while b_pad % tb:
        tb -= 128
    return tb


def _mlp_T(xT, w1, b1, w2, b2):
    """net(x) in batch-in-lanes layout: xT (IN_F, TB) -> (OUT_F, TB)."""
    # Layer 1: h = W1 @ xT + b1.  Unrolled VPU broadcast-MACs over K=3, with
    # the bias folded into the first term (no standalone bias broadcast).
    h = w1[:, 0:1] * xT[0:1, :] + b1
    for k in range(1, IN_F):
        h = h + w1[:, k:k + 1] * xT[k:k + 1, :]
    h = jnp.tanh(h)                                   # EUP, full-width vregs

    # Layer 2: out = W2 @ h + b2.  Unrolled over K=10, bias folded likewise.
    out = w2[:, 0:1] * h[0:1, :] + b2
    for k in range(1, HID_F):
        out = out + w2[:, k:k + 1] * h[k:k + 1, :]
    return out


def odefunct_kernel(xT_ref, w1_ref, b1_ref, w2_ref, b2_ref, oT_ref):
    oT_ref[...] = _mlp_T(xT_ref[...], w1_ref[...], b1_ref[...],
                         w2_ref[...], b2_ref[...]).astype(oT_ref.dtype)


def odefunct_euler_kernel(xT_ref, w1_ref, b1_ref, w2_ref, b2_ref, oT_ref, *,
                          n_steps, dt):
    # Fused explicit-Euler integration: state stays in vregs across all steps;
    # weights/biases are loaded once per tile and reused every step.
    w1 = w1_ref[...]
    b1 = b1_ref[...]
    w2 = w2_ref[...]
    b2 = b2_ref[...]
    dt = jnp.float32(dt)

    def step(_, xT):
        return xT + dt * _mlp_T(xT, w1, b1, w2, b2)

    oT_ref[...] = lax.fori_loop(0, n_steps, step, xT_ref[...]).astype(oT_ref.dtype)


def _pallas_apply_T(kernel_fn, xT, w1, b1, w2, b2, *, out_rows, tb):
    """Run `kernel_fn` over the batch (lane) axis of xT: (R, B_pad) layout."""
    _, b_pad = xT.shape
    assert b_pad % 128 == 0, "batch-in-lanes layout must be padded to 128"
    tb_eff = _pick_tile(b_pad, tb)
    n_blocks = b_pad // tb_eff
    const0 = lambda i: (0, 0)

    return pl.pallas_call(
        kernel_fn,
        out_shape=jax.ShapeDtypeStruct((out_rows, b_pad), jnp.float32),
        grid=(n_blocks,),
        in_specs=[
            pl.BlockSpec((IN_F, tb_eff), lambda i: (0, i)),   # x^T tile
            pl.BlockSpec((HID_F, IN_F), const0),              # W1 (resident)
            pl.BlockSpec((HID_F, 1), const0),                 # b1
            pl.BlockSpec((OUT_F, HID_F), const0),             # W2
            pl.BlockSpec((OUT_F, 1), const0),                 # b2
        ],
        out_specs=pl.BlockSpec((out_rows, tb_eff), lambda i: (0, i)),
        compiler_params=pltpu.CompilerParams(
            dimension_semantics=("parallel",)),                # megacore-shard
    )(xT, w1, b1, w2, b2)


def odefunct_forward_T(xT, w1, b1, w2, b2, *, tb=32768):
    """Forward in (IN_F, B_pad) batch-in-lanes layout (B_pad % 128 == 0).

    This is the integrator-facing entry point: keep the ODE state in this
    layout across time steps so no per-call transpose/pad HBM passes are paid.
    """
    return _pallas_apply_T(odefunct_kernel, xT, w1, b1, w2, b2,
                           out_rows=OUT_F, tb=tb)


def odefunct_forward(x, w1, b1, w2, b2, *, tb=32768):
    """PyTorch-style forward: x (B, 3) float32 -> (B, 3)."""
    B = x.shape[0]
    if B == 0:                                        # empty-batch guard
        return jnp.zeros((0, OUT_F), x.dtype)
    tb_eff = min(tb, _round_up(B, 128))
    b_pad = _round_up(B, tb_eff)
    xT = jnp.pad(x.T, ((0, 0), (0, b_pad - B)))       # single re-layout pass
    outT = odefunct_forward_T(xT, w1, b1, w2, b2, tb=tb_eff)
    return outT[:, :B].T


def odefunct_euler_solve(x, w1, b1, w2, b2, *, dt, n_steps, tb=32768):
    """n_steps of explicit Euler (x <- x + dt * net(x)) fused in one kernel."""
    B = x.shape[0]
    if B == 0:
        return jnp.zeros((0, IN_F), x.dtype)
    tb_eff = min(tb, _round_up(B, 128))
    b_pad = _round_up(B, tb_eff)
    xT = jnp.pad(x.T, ((0, 0), (0, b_pad - B)))
    kernel = functools.partial(odefunct_euler_kernel, n_steps=n_steps, dt=dt)
    outT = _pallas_apply_T(kernel, xT, w1, b1, w2, b2,
                           out_rows=IN_F, tb=tb_eff)
    return outT[:, :B].T


def init_params(key):
    # nn.init.normal_(weight, mean=0, std=0.2); bias = 0.  Torch layout
    # (out_features, in_features); biases stored as columns for lane-broadcast.
    k1, k2 = jax.random.split(key)
    w1 = 0.2 * jax.random.normal(k1, (HID_F, IN_F), dtype=jnp.float32)
    b1 = jnp.zeros((HID_F, 1), dtype=jnp.float32)
    w2 = 0.2 * jax.random.normal(k2, (OUT_F, HID_F), dtype=jnp.float32)
    b2 = jnp.zeros((OUT_F, 1), dtype=jnp.float32)
    return w1, b1, w2, b2


def reference_forward(x, w1, b1, w2, b2):
    h = jnp.tanh(x @ w1.T + b1.reshape(1, -1))
    return h @ w2.T + b2.reshape(1, -1)


def reference_euler(x, w1, b1, w2, b2, dt, n_steps):
    dt = jnp.float32(dt)

    def step(_, xx):
        return xx + dt * reference_forward(xx, w1, b1, w2, b2)

    return lax.fori_loop(0, n_steps, step, x)


if __name__ == "__main__":
    key = jax.random.PRNGKey(0)
    kx, kp = jax.random.split(key)

    B = 8  # small batch of states, each with 3 species concentrations
    x = jax.random.normal(kx, (B, IN_F), dtype=jnp.float32)
    w1, b1, w2, b2 = init_params(kp)

    # Single forward pass (the module's forward semantics).
    out = jax.block_until_ready(odefunct_forward(x, w1, b1, w2, b2))
    ref = reference_forward(x, w1, b1, w2, b2)
    assert out.shape == (B, OUT_F)
    assert jnp.allclose(out, ref, atol=1e-5, rtol=1e-5), "forward mismatch"

    # Fused multi-step Euler solve (state resident in VMEM/vregs).
    dt, n_steps = 0.05, 32
    xs = jax.block_until_ready(
        odefunct_euler_solve(x, w1, b1, w2, b2, dt=dt, n_steps=n_steps))
    xs_ref = reference_euler(x, w1, b1, w2, b2, dt, n_steps)
    assert xs.shape == (B, IN_F)
    assert jnp.allclose(xs, xs_ref, atol=1e-4, rtol=1e-4), "euler mismatch"

    print("KERNEL_OK")
</pallas_src>

<mosaic_0001>
module attributes {stable_mosaic.version = 11 : i64} {
  func.func @odefunct_kernel(%arg0: i32, %arg1: memref<3x128xf32, #tpu.memory_space<vmem>>, %arg2: memref<10x3xf32, #tpu.memory_space<vmem>>, %arg3: memref<10x1xf32, #tpu.memory_space<vmem>>, %arg4: memref<3x10xf32, #tpu.memory_space<vmem>>, %arg5: memref<3x1xf32, #tpu.memory_space<vmem>>, %arg6: memref<3x128xf32, #tpu.memory_space<vmem>>) attributes {dimension_semantics = [#tpu.dimension_semantics<parallel>], iteration_bounds = array<i64: 1>, scalar_prefetch = 0 : i64, scratch_operands = 0 : i64, tpu.core_type = #tpu.core_type<tc>, window_params = [{transform_indices = @transform_0, window_bounds = array<i64: 3, 128>}, {pipeline_mode = #tpu.pipeline_mode<synchronous>, transform_indices = @transform_1, window_bounds = array<i64: 10, 3>}, {pipeline_mode = #tpu.pipeline_mode<synchronous>, transform_indices = @transform_2, window_bounds = array<i64: 10, 1>}, {pipeline_mode = #tpu.pipeline_mode<synchronous>, transform_indices = @transform_3, window_bounds = array<i64: 3, 10>}, {pipeline_mode = #tpu.pipeline_mode<synchronous>, transform_indices = @transform_4, window_bounds = array<i64: 3, 1>}, {transform_indices = @transform_5, window_bounds = array<i64: 3, 128>}]} {
    %c0 = arith.constant 0 : index
    %c0_0 = arith.constant 0 : index
    %0 = vector.load %arg1[%c0, %c0_0] : memref<3x128xf32, #tpu.memory_space<vmem>>, vector<3x128xf32>
    %c0_1 = arith.constant 0 : index
    %c0_2 = arith.constant 0 : index
    %1 = vector.load %arg2[%c0_1, %c0_2] : memref<10x3xf32, #tpu.memory_space<vmem>>, vector<10x3xf32>
    %c0_3 = arith.constant 0 : index
    %c0_4 = arith.constant 0 : index
    %2 = vector.load %arg3[%c0_3, %c0_4] : memref<10x1xf32, #tpu.memory_space<vmem>>, vector<10x1xf32>
    %c0_5 = arith.constant 0 : index
    %c0_6 = arith.constant 0 : index
    %3 = vector.load %arg4[%c0_5, %c0_6] : memref<3x10xf32, #tpu.memory_space<vmem>>, vector<3x10xf32>
    %c0_7 = arith.constant 0 : index
    %c0_8 = arith.constant 0 : index
    %4 = vector.load %arg5[%c0_7, %c0_8] : memref<3x1xf32, #tpu.memory_space<vmem>>, vector<3x1xf32>
    %5 = vector.extract_strided_slice %1 {offsets = [0, 0], sizes = [10, 1], strides = [1, 1]} : vector<10x3xf32> to vector<10x1xf32>
    %6 = vector.extract_strided_slice %0 {offsets = [0, 0], sizes = [1, 128], strides = [1, 1]} : vector<3x128xf32> to vector<1x128xf32>
    %7 = vector.broadcast %5 : vector<10x1xf32> to vector<10x128xf32>
    %8 = vector.broadcast %6 : vector<1x128xf32> to vector<10x128xf32>
    %9 = arith.mulf %7, %8 : vector<10x128xf32>
    %10 = vector.broadcast %2 : vector<10x1xf32> to vector<10x128xf32>
    %11 = arith.addf %9, %10 : vector<10x128xf32>
    %12 = vector.extract_strided_slice %1 {offsets = [0, 1], sizes = [10, 1], strides = [1, 1]} : vector<10x3xf32> to vector<10x1xf32>
    %13 = vector.extract_strided_slice %0 {offsets = [1, 0], sizes = [1, 128], strides = [1, 1]} : vector<3x128xf32> to vector<1x128xf32>
    %14 = vector.broadcast %12 : vector<10x1xf32> to vector<10x128xf32>
    %15 = vector.broadcast %13 : vector<1x128xf32> to vector<10x128xf32>
    %16 = arith.mulf %14, %15 : vector<10x128xf32>
    %17 = arith.addf %11, %16 : vector<10x128xf32>
    %18 = vector.extract_strided_slice %1 {offsets = [0, 2], sizes = [10, 1], strides = [1, 1]} : vector<10x3xf32> to vector<10x1xf32>
    %19 = vector.extract_strided_slice %0 {offsets = [2, 0], sizes = [1, 128], strides = [1, 1]} : vector<3x128xf32> to vector<1x128xf32>
    %20 = vector.broadcast %18 : vector<10x1xf32> to vector<10x128xf32>
    %21 = vector.broadcast %19 : vector<1x128xf32> to vector<10x128xf32>
    %22 = arith.mulf %20, %21 : vector<10x128xf32>
    %23 = arith.addf %17, %22 : vector<10x128xf32>
    %24 = math.tanh %23 : vector<10x128xf32>
    %25 = vector.extract_strided_slice %3 {offsets = [0, 0], sizes = [3, 1], strides = [1, 1]} : vector<3x10xf32> to vector<3x1xf32>
    %26 = vector.extract_strided_slice %24 {offsets = [0, 0], sizes = [1, 128], strides = [1, 1]} : vector<10x128xf32> to vector<1x128xf32>
    %27 = vector.broadcast %25 : vector<3x1xf32> to vector<3x128xf32>
    %28 = vector.broadcast %26 : vector<1x128xf32> to vector<3x128xf32>
    %29 = arith.mulf %27, %28 : vector<3x128xf32>
    %30 = vector.broadcast %4 : vector<3x1xf32> to vector<3x128xf32>
    %31 = arith.addf %29, %30 : vector<3x128xf32>
    %32 = vector.extract_strided_slice %3 {offsets = [0, 1], sizes = [3, 1], strides = [1, 1]} : vector<3x10xf32> to vector<3x1xf32>
    %33 = vector.extract_strided_slice %24 {offsets = [1, 0], sizes = [1, 128], strides = [1, 1]} : vector<10x128xf32> to vector<1x128xf32>
    %34 = vector.broadcast %32 : vector<3x1xf32> to vector<3x128xf32>
    %35 = vector.broadcast %33 : vector<1x128xf32> to vector<3x128xf32>
    %36 = arith.mulf %34, %35 : vector<3x128xf32>
    %37 = arith.addf %31, %36 : vector<3x128xf32>
    %38 = vector.extract_strided_slice %3 {offsets = [0, 2], sizes = [3, 1], strides = [1, 1]} : vector<3x10xf32> to vector<3x1xf32>
    %39 = vector.extract_strided_slice %24 {offsets = [2, 0], sizes = [1, 128], strides = [1, 1]} : vector<10x128xf32> to vector<1x128xf32>
    %40 = vector.broadcast %38 : vector<3x1xf32> to vector<3x128xf32>
    %41 = vector.broadcast %39 : vector<1x128xf32> to vector<3x128xf32>
    %42 = arith.mulf %40, %41 : vector<3x128xf32>
    %43 = arith.addf %37, %42 : vector<3x128xf32>
    %44 = vector.extract_strided_slice %3 {offsets = [0, 3], sizes = [3, 1], strides = [1, 1]} : vector<3x10xf32> to vector<3x1xf32>
    %45 = vector.extract_strided_slice %24 {offsets = [3, 0], sizes = [1, 128], strides = [1, 1]} : vector<10x128xf32> to vector<1x128xf32>
    %46 = vector.broadcast %44 : vector<3x1xf32> to vector<3x128xf32>
    %47 = vector.broadcast %45 : vector<1x128xf32> to vector<3x128xf32>
    %48 = arith.mulf %46, %47 : vector<3x128xf32>
    %49 = arith.addf %43, %48 : vector<3x128xf32>
    %50 = vector.extract_strided_slice %3 {offsets = [0, 4], sizes = [3, 1], strides = [1, 1]} : vector<3x10xf32> to vector<3x1xf32>
    %51 = vector.extract_strided_slice %24 {offsets = [4, 0], sizes = [1, 128], strides = [1, 1]} : vector<10x128xf32> to vector<1x128xf32>
    %52 = vector.broadcast %50 : vector<3x1xf32> to vector<3x128xf32>
    %53 = vector.broadcast %51 : vector<1x128xf32> to vector<3x128xf32>
    %54 = arith.mulf %52, %53 : vector<3x128xf32>
    %55 = arith.addf %49, %54 : vector<3x128xf32>
    %56 = vector.extract_strided_slice %3 {offsets = [0, 5], sizes = [3, 1], strides = [1, 1]} : vector<3x10xf32> to vector<3x1xf32>
    %57 = vector.extract_strided_slice %24 {offsets = [5, 0], sizes = [1, 128], strides = [1, 1]} : vector<10x128xf32> to vector<1x128xf32>
    %58 = vector.broadcast %56 : vector<3x1xf32> to vector<3x128xf32>
    %59 = vector.broadcast %57 : vector<1x128xf32> to vector<3x128xf32>
    %60 = arith.mulf %58, %59 : vector<3x128xf32>
    %61 = arith.addf %55, %60 : vector<3x128xf32>
    %62 = vector.extract_strided_slice %3 {offsets = [0, 6], sizes = [3, 1], strides = [1, 1]} : vector<3x10xf32> to vector<3x1xf32>
    %63 = vector.extract_strided_slice %24 {offsets = [6, 0], sizes = [1, 128], strides = [1, 1]} : vector<10x128xf32> to vector<1x128xf32>
    %64 = vector.broadcast %62 : vector<3x1xf32> to vector<3x128xf32>
    %65 = vector.broadcast %63 : vector<1x128xf32> to vector<3x128xf32>
    %66 = arith.mulf %64, %65 : vector<3x128xf32>
    %67 = arith.addf %61, %66 : vector<3x128xf32>
    %68 = vector.extract_strided_slice %3 {offsets = [0, 7], sizes = [3, 1], strides = [1, 1]} : vector<3x10xf32> to vector<3x1xf32>
    %69 = vector.extract_strided_slice %24 {offsets = [7, 0], sizes = [1, 128], strides = [1, 1]} : vector<10x128xf32> to vector<1x128xf32>
    %70 = vector.broadcast %68 : vector<3x1xf32> to vector<3x128xf32>
    %71 = vector.broadcast %69 : vector<1x128xf32> to vector<3x128xf32>
    %72 = arith.mulf %70, %71 : vector<3x128xf32>
    %73 = arith.addf %67, %72 : vector<3x128xf32>
    %74 = vector.extract_strided_slice %3 {offsets = [0, 8], sizes = [3, 1], strides = [1, 1]} : vector<3x10xf32> to vector<3x1xf32>
    %75 = vector.extract_strided_slice %24 {offsets = [8, 0], sizes = [1, 128], strides = [1, 1]} : vector<10x128xf32> to vector<1x128xf32>
    %76 = vector.broadcast %74 : vector<3x1xf32> to vector<3x128xf32>
    %77 = vector.broadcast %75 : vector<1x128xf32> to vector<3x128xf32>
    %78 = arith.mulf %76, %77 : vector<3x128xf32>
    %79 = arith.addf %73, %78 : vector<3x128xf32>
    %80 = vector.extract_strided_slice %3 {offsets = [0, 9], sizes = [3, 1], strides = [1, 1]} : vector<3x10xf32> to vector<3x1xf32>
    %81 = vector.extract_strided_slice %24 {offsets = [9, 0], sizes = [1, 128], strides = [1, 1]} : vector<10x128xf32> to vector<1x128xf32>
    %82 = vector.broadcast %80 : vector<3x1xf32> to vector<3x128xf32>
    %83 = vector.broadcast %81 : vector<1x128xf32> to vector<3x128xf32>
    %84 = arith.mulf %82, %83 : vector<3x128xf32>
    %85 = arith.addf %79, %84 : vector<3x128xf32>
    %c0_9 = arith.constant 0 : index
    %c0_10 = arith.constant 0 : index
    %86 = vector.load %arg6[%c0_9, %c0_10] : memref<3x128xf32, #tpu.memory_space<vmem>>, vector<3x128xf32>
    tpu.vector_store %arg6[%c0_9, %c0_10], %85 {strides = array<i32>} : memref<3x128xf32, #tpu.memory_space<vmem>>, vector<3x128xf32>,
    return
  }
  func.func @transform_0(%arg0: i32) -> (i32, i32) {
    %c0_i32 = arith.constant 0 : i32
    %c0_i32_0 = arith.constant 0 : i32
    return %c0_i32, %arg0 : i32, i32
  }
  func.func @transform_1(%arg0: i32) -> (i32, i32) {
    %c0_i32 = arith.constant 0 : i32
    %c0_i32_0 = arith.constant 0 : i32
    %c0_i32_1 = arith.constant 0 : i32
    return %c0_i32, %c0_i32_0 : i32, i32
  }
  func.func @transform_2(%arg0: i32) -> (i32, i32) {
    %c0_i32 = arith.constant 0 : i32
    %c0_i32_0 = arith.constant 0 : i32
    %c0_i32_1 = arith.constant 0 : i32
    return %c0_i32, %c0_i32_0 : i32, i32
  }
  func.func @transform_3(%arg0: i32) -> (i32, i32) {
    %c0_i32 = arith.constant 0 : i32
    %c0_i32_0 = arith.constant 0 : i32
    %c0_i32_1 = arith.constant 0 : i32
    return %c0_i32, %c0_i32_0 : i32, i32
  }
  func.func @transform_4(%arg0: i32) -> (i32, i32) {
    %c0_i32 = arith.constant 0 : i32
    %c0_i32_0 = arith.constant 0 : i32
    %c0_i32_1 = arith.constant 0 : i32
    return %c0_i32, %c0_i32_0 : i32, i32
  }
  func.func @transform_5(%arg0: i32) -> (i32, i32) {
    %c0_i32 = arith.constant 0 : i32
    %c0_i32_0 = arith.constant 0 : i32
    return %c0_i32, %arg0 : i32, i32
  }
}

</mosaic_0001>

<llo_original>
// kernel: tpu_custom_call.1
$region0: #{tpu_custom_call.1}
  #allocation0 [shape = 'u32[]', space=smem, size = 0x4, offset = 0x4, fixed_abs, tag = 'smem constant byte address 0x4 - core index']
  #allocation1 [shape = 'u32[144,128]{1,0:T(1,128)}', space=vmem, size = 0x12000, scoped, tag = 'internal scratch']
  %s0 = inlined_call_operand.vmem [shape: f32[3,128], index: 0, kind: input, shape index: {}]
  %s1 = inlined_call_operand.vmem [shape: f32[10,3], index: 1, kind: input, shape index: {}]
  %s2 = inlined_call_operand.vmem [shape: f32[10,1], index: 2, kind: input, shape index: {}]
  %s3 = inlined_call_operand.vmem [shape: f32[3,10], index: 3, kind: input, shape index: {}]
  %s4 = inlined_call_operand.vmem [shape: f32[3,1], index: 4, kind: input, shape index: {}]
  %s5 = inlined_call_operand.hbm [shape: f32[3,128], index: 5, kind: output, shape index: {}]
  %s6 = sld [smem:[#allocation0]]
  $region30: #{tpu_custom_call.1} parent=0
    _
  %s8 = ssub.s32 1, %s6
  %s9 = scalar_select 0, %s8, %s6
  $region1: #{tpu_custom_call.1} parent=0
    #allocation2 [shape = 'u8[2048]{0}', space=vmem, size = 0x800, scoped, tag = 'output window, operand 0, single buffered']
    #allocation3 [shape = 's32[1]{0}', space=sflag, size = 0x4, scoped, tag = 'scoped memory for tpu_custom_call.1']
    %10 = vsyncpa [#allocation3], 0
    // Predicated region
    $region2: #{tpu_custom_call.1} parent=1 // pred_check
      _
    $region3: #{tpu_custom_call.1} parent=1 // pred_check_branch
      %12 = sbr.rel (0) target = $region5
    $region4: #{tpu_custom_call.1} parent=1 // pred_region
      _
    $region5: #{tpu_custom_call.1} parent=1 // pred_fallthru
      _
    // Predicated region
    $region6: #{tpu_custom_call.1} parent=1 // pred_check
      _
    $region7: #{tpu_custom_call.1} parent=1 // pred_check_branch
      %14 = sbr.rel (0) target = $region9
    $region8: #{tpu_custom_call.1} parent=1 // pred_region
      _
    $region9: #{tpu_custom_call.1} parent=1 // pred_fallthru
      _
    // Predicated region
    $region10: #{tpu_custom_call.1} parent=1 // pred_check
      _
    $region11: #{tpu_custom_call.1} parent=1 // pred_check_branch
      %16 = sbr.rel (0) target = $region13
    $region12: #{tpu_custom_call.1} parent=1 // pred_region
      _
    $region13: #{tpu_custom_call.1} parent=1 // pred_fallthru
      _
    // Predicated region
    $region14: #{tpu_custom_call.1} parent=1 // pred_check
      _
    $region15: #{tpu_custom_call.1} parent=1 // pred_check_branch
      %18 = sbr.rel (0) target = $region17
    $region16: #{tpu_custom_call.1} parent=1 // pred_region
      _
    $region17: #{tpu_custom_call.1} parent=1 // pred_fallthru
      _
    // Predicated region
    $region18: #{tpu_custom_call.1} parent=1 // pred_check
      _
    $region19: #{tpu_custom_call.1} parent=1 // pred_check_branch
      %20 = sbr.rel (0) target = $region21
    $region20: #{tpu_custom_call.1} parent=1 // pred_region
      _
    $region21: #{tpu_custom_call.1} parent=1 // pred_fallthru
      _
    %v21 = vld [vmem:[%s0] sm:$0x7]
    %v22 = vld [vmem:[%s1] sm:$0xff]
    %v23 = vld [vmem:[%s1 + $0x8] sm:$0x3]
    %v24 = vld [vmem:[%s2] sm:$0xff]
    %v25 = vld [vmem:[%s2 + $0x8] sm:$0x3]
    %v26 = vld [vmem:[%s3] sm:$0x7]
    %v27 = vld [vmem:[%s4] sm:$0x7]
    %29 = vset.pattern.permute.xlu0 0
    %30 = vperm.xlu0 %29, %v22
    %v31 = vpop.permute.xlu0 %30
    %34 = vset.pattern.permute.xlu0 0
    %35 = vperm.xlu0 %34, %v23
    %v36 = vpop.permute.xlu0 %35
    %v38 = vlaneseq
    %v39 = vshrl.u32 %v38, 7
    %v40 = vsub.s32 0, %v39
    %v41 = vrot.slane %v21, %v40
    %v42 = vmul.f32 %v31, %v41
    %v43 = vmul.f32 %v36, %v41
    %45 = vset.pattern.permute.xlu0 0
    %46 = vperm.xlu0 %45, %v24
    %v47 = vpop.permute.xlu0 %46
    %50 = vset.pattern.permute.xlu0 0
    %51 = vperm.xlu0 %50, %v25
    %v52 = vpop.permute.xlu0 %51
    %v54 = vadd.f32 %v42, %v47
    %v55 = vadd.f32 %v43, %v52
    %56 = vset.pattern.permute.xlu0 1
    %57 = vperm.xlu0 %56, %v22
    %v58 = vpop.permute.xlu0 %57
    %60 = vset.pattern.permute.xlu0 1
    %61 = vperm.xlu0 %60, %v23
    %v62 = vpop.permute.xlu0 %61
    %v64 = vlaneseq
    %v65 = vshrl.u32 %v64, 7
    %v66 = vsub.s32 1, %v65
    %v67 = vrot.slane %v21, %v66
    %v68 = vmul.f32 %v58, %v67
    %v69 = vmul.f32 %v62, %v67
    %v70 = vadd.f32 %v54, %v68
    %v71 = vadd.f32 %v55, %v69
    %72 = vset.pattern.permute.xlu0 2
    %73 = vperm.xlu0 %72, %v22
    %v74 = vpop.permute.xlu0 %73
    %76 = vset.pattern.permute.xlu0 2
    %77 = vperm.xlu0 %76, %v23
    %v78 = vpop.permute.xlu0 %77
    %v80 = vlaneseq
    %v81 = vshrl.u32 %v80, 7
    %v82 = vsub.s32 2, %v81
    %v83 = vrot.slane %v21, %v82
    %v84 = vmul.f32 %v74, %v83
    %v85 = vmul.f32 %v78, %v83
    %v86 = vadd.f32 %v70, %v84
    %v87 = vadd.f32 %v71, %v85
    %v88 = vtanh.pop %v86
    %v89 = vtanh.pop %v87
    %91 = vset.pattern.permute.xlu0 0
    %92 = vperm.xlu0 %91, %v26
    %v93 = vpop.permute.xlu0 %92
    %v95 = vlaneseq
    %v96 = vshrl.u32 %v95, 7
    %v97 = vsub.s32 0, %v96
    %v98 = vrot.slane %v88, %v97
    %v99 = vmul.f32 %v93, %v98
    %101 = vset.pattern.permute.xlu0 0
    %102 = vperm.xlu0 %101, %v27
    %v103 = vpop.permute.xlu0 %102
    %v105 = vadd.f32 %v99, %v103
    %106 = vset.pattern.permute.xlu0 1
    %107 = vperm.xlu0 %106, %v26
    %v108 = vpop.permute.xlu0 %107
    %v110 = vlaneseq
    %v111 = vshrl.u32 %v110, 7
    %v112 = vsub.s32 1, %v111
    %v113 = vrot.slane %v88, %v112
    %v114 = vmul.f32 %v108, %v113
    %v115 = vadd.f32 %v105, %v114
    %116 = vset.pattern.permute.xlu0 2
    %117 = vperm.xlu0 %116, %v26
    %v118 = vpop.permute.xlu0 %117
    %v120 = vlaneseq
    %v121 = vshrl.u32 %v120, 7
    %v122 = vsub.s32 2, %v121
    %v123 = vrot.slane %v88, %v122
    %v124 = vmul.f32 %v118, %v123
    %v125 = vadd.f32 %v115, %v124
    %126 = vset.pattern.permute.xlu0 3
    %127 = vperm.xlu0 %126, %v26
    %v128 = vpop.permute.xlu0 %127
    %v130 = vlaneseq
    %v131 = vshrl.u32 %v130, 7
    %v132 = vsub.s32 3, %v131
    %v133 = vrot.slane %v88, %v132
    %v134 = vmul.f32 %v128, %v133
    %v135 = vadd.f32 %v125, %v134
    %136 = vset.pattern.permute.xlu0 4
    %137 = vperm.xlu0 %136, %v26
    %v138 = vpop.permute.xlu0 %137
    %v140 = vlaneseq
    %v141 = vshrl.u32 %v140, 7
    %v142 = vsub.s32 4, %v141
    %v143 = vrot.slane %v88, %v142
    %v144 = vmul.f32 %v138, %v143
    %v145 = vadd.f32 %v135, %v144
    %146 = vset.pattern.permute.xlu0 5
    %147 = vperm.xlu0 %146, %v26
    %v148 = vpop.permute.xlu0 %147
    %v150 = vlaneseq
    %v151 = vshrl.u32 %v150, 7
    %v152 = vsub.s32 5, %v151
    %v153 = vrot.slane %v88, %v152
    %v154 = vmul.f32 %v148, %v153
    %v155 = vadd.f32 %v145, %v154
    %156 = vset.pattern.permute.xlu0 6
    %157 = vperm.xlu0 %156, %v26
    %v158 = vpop.permute.xlu0 %157
    %v160 = vlaneseq
    %v161 = vshrl.u32 %v160, 7
    %v162 = vsub.s32 6, %v161
    %v163 = vrot.slane %v88, %v162
    %v164 = vmul.f32 %v158, %v163
    %v165 = vadd.f32 %v155, %v164
    %166 = vset.pattern.permute.xlu0 7
    %167 = vperm.xlu0 %166, %v26
    %v168 = vpop.permute.xlu0 %167
    %v170 = vlaneseq
    %v171 = vshrl.u32 %v170, 7
    %v172 = vsub.s32 7, %v171
    %v173 = vrot.slane %v88, %v172
    %v174 = vmul.f32 %v168, %v173
    %v175 = vadd.f32 %v165, %v174
    %176 = vset.pattern.permute.xlu0 8
    %177 = vperm.xlu0 %176, %v26
    %v178 = vpop.permute.xlu0 %177
    %v180 = vlaneseq
    %v181 = vshrl.u32 %v180, 7
    %v182 = vsub.s32 0, %v181
    %v183 = vrot.slane %v89, %v182
    %v184 = vmul.f32 %v178, %v183
    %v185 = vadd.f32 %v175, %v184
    %186 = vset.pattern.permute.xlu0 9
    %187 = vperm.xlu0 %186, %v26
    %v188 = vpop.permute.xlu0 %187
    %v190 = vlaneseq
    %v191 = vshrl.u32 %v190, 7
    %v192 = vsub.s32 1, %v191
    %v193 = vrot.slane %v89, %v192
    %v194 = vmul.f32 %v188, %v193
    %v195 = vadd.f32 %v185, %v194
    %196 = vst [vmem:[#allocation2] sm:$0x7] %v195
    // Predicated region
    $region22: #{tpu_custom_call.1} parent=1 // pred_check
      _
    $region23: #{tpu_custom_call.1} parent=1 // pred_check_branch
      %198 = sbr.rel (0) target = $region25
    $region24: #{tpu_custom_call.1} parent=1 // pred_region
      %s200 = ssub.s32 64, 64
      %201 = vsyncadd [#allocation3], %s200
      %s203 = sshll.u32 [#allocation2], 4
      %s204 = int_to_ptr.vmem [resolvable:$true] %s203
      %206 = dma.vmem_to_hbm [thread:$0]  %s204, 64, %s5, [#allocation3]
    $region25: #{tpu_custom_call.1} parent=1 // pred_fallthru
      _
    // Predicated region
    $region26: #{tpu_custom_call.1} parent=1 // pred_check
      _
    $region27: #{tpu_custom_call.1} parent=1 // pred_check_branch
      %208 = sbr.rel (0) target = $region29
    $region28: #{tpu_custom_call.1} parent=1 // pred_region
      %209 = dma.done [#allocation3], 64
    $region29: #{tpu_custom_call.1} parent=1 // pred_fallthru
      _
    %210 = vsyncpa [#allocation3], 1

</llo_original>
